<compile_context>
chip_gen: v7x
topology: tpu7x:2x2x1
jax: 0.10.0
libtpu: 0.0.40
codegen_flags: <defaults>
</compile_context>

<pallas_src>
import math

import jax
import jax.numpy as jnp
from jax import lax
from jax.experimental import pallas as pl
from jax.experimental.pallas import tpu as pltpu


def _round_up(n, m):
    return ((n + m - 1) // m) * m


def _embedding_block_kernel(idx_ref, emb_ref, out_ref):
    """Gather R embedding rows via a one-hot matmul on the MXU.

    idx_ref: (R, 1)  int32 -- offset-added row ids for this block
    emb_ref: (Vp, D) f32   -- full (row-padded) table, VMEM resident
    out_ref: (R, D)  f32
    """
    r = idx_ref.shape[0]
    vp = emb_ref.shape[0]
    row_ids = lax.broadcasted_iota(jnp.int32, (r, vp), 1)          # (R, Vp)
    onehot = (idx_ref[...] == row_ids).astype(emb_ref.dtype)       # (R, Vp), exact 0/1
    out_ref[...] = jnp.dot(
        onehot,
        emb_ref[...],
        preferred_element_type=jnp.float32,
        precision=lax.Precision.HIGHEST,    # exact f32 row copy through the MXU
    ).astype(out_ref.dtype)


def features_embedding(x, embedding_weight, offsets, *, block_rows=256):
    """x: (B, F) int indices; embedding_weight: (V, D) f32; offsets: (F,) int.

    Returns (B, F, D) f32, matching torch's Embedding(x + offsets)."""
    B, F = x.shape
    V, D = embedding_weight.shape

    # Host-side glue: fuse the per-field offset add, flatten to row ids.
    # (int64 -> int32 is fine for vocab < 2^31.)
    idx_flat = (x.astype(jnp.int32) + offsets.astype(jnp.int32)[None, :]).reshape(-1)
    n_rows = B * F

    # Batch R rows per grid step; pad the row count and the vocab to multiples of 8.
    R = min(block_rows, _round_up(n_rows, 8))
    n_pad = _round_up(n_rows, R)
    idx_col = jnp.pad(idx_flat, (0, n_pad - n_rows)).reshape(n_pad, 1)

    Vp = _round_up(V, 8)
    emb = jnp.pad(embedding_weight, ((0, Vp - V), (0, 0)))

    # Guard the VMEM budget of this path (resident table + per-block one-hot).
    assert (Vp * D + R * Vp) * 4 < 16 * 1024 * 1024, (
        "vocab too large for the VMEM-resident one-hot gather; "
        "use the HBM DMA-gather path instead (see TODO)")

    out = pl.pallas_call(
        _embedding_block_kernel,
        out_shape=jax.ShapeDtypeStruct((n_pad, D), embedding_weight.dtype),
        grid=(n_pad // R,),
        in_specs=[
            pl.BlockSpec((R, 1), lambda i: (i, 0)),    # row ids for this block
            pl.BlockSpec((Vp, D), lambda i: (0, 0)),   # whole table, kept resident
        ],
        out_specs=pl.BlockSpec((R, D), lambda i: (i, 0)),
        compiler_params=pltpu.CompilerParams(
            dimension_semantics=("parallel",),          # independent blocks; 2 TCs on v7x
            vmem_limit_bytes=48 * 1024 * 1024,          # > v5e's 16 MiB default, < v7x's 64 MiB
        ),
    )(idx_col, emb)

    return out[:n_rows].reshape(B, F, D)


def make_params(field_dims, embed_dim, key):
    """Deterministic xavier-uniform embedding table + field offsets."""
    vocab = int(sum(field_dims))
    bound = math.sqrt(6.0 / (vocab + embed_dim))   # xavier_uniform_ on (vocab, embed_dim)
    weight = jax.random.uniform(
        key, (vocab, embed_dim), dtype=jnp.float32, minval=-bound, maxval=bound
    )
    offsets = jnp.array(
        [0] + list(jnp.cumsum(jnp.array(field_dims))[:-1]), dtype=jnp.int32
    )
    return weight, offsets


if __name__ == "__main__":
    key = jax.random.PRNGKey(0)
    k_w, k_x = jax.random.split(key)

    field_dims = (10, 7, 5, 3)   # 4 categorical fields
    embed_dim = 16
    batch = 2

    weight, offsets = make_params(field_dims, embed_dim, k_w)

    # Per-field indices in range [0, field_dims[f])
    maxs = jnp.array(field_dims, dtype=jnp.int32)
    u = jax.random.uniform(k_x, (batch, len(field_dims)))
    x = (u * maxs[None, :]).astype(jnp.int32)                      # (B, F)

    out = features_embedding(x, weight, offsets)
    out = jax.block_until_ready(out)

    # Reference check in plain JAX (exact embedding lookup).
    ref = jnp.take(weight, x + offsets[None, :], axis=0)
    assert out.shape == (batch, len(field_dims), embed_dim)
    assert jnp.allclose(out, ref, rtol=1e-5, atol=1e-6), "mismatch vs reference embedding lookup"

    print("KERNEL_OK")
</pallas_src>

<mosaic_0001>
module attributes {stable_mosaic.version = 11 : i64} {
  func.func @_embedding_block_kernel(%arg0: i32, %arg1: memref<8x1xi32, #tpu.memory_space<vmem>>, %arg2: memref<32x16xf32, #tpu.memory_space<vmem>>, %arg3: memref<8x16xf32, #tpu.memory_space<vmem>>) attributes {dimension_semantics = [#tpu.dimension_semantics<parallel>], iteration_bounds = array<i64: 1>, scalar_prefetch = 0 : i64, scratch_operands = 0 : i64, tpu.core_type = #tpu.core_type<tc>, window_params = [{transform_indices = @transform_0, window_bounds = array<i64: 8, 1>}, {pipeline_mode = #tpu.pipeline_mode<synchronous>, transform_indices = @transform_1, window_bounds = array<i64: 32, 16>}, {transform_indices = @transform_2, window_bounds = array<i64: 8, 16>}]} {
    %0 = tpu.iota {dimensions = array<i32: 1>} : vector<8x32xi32>
    %c0 = arith.constant 0 : index
    %c0_0 = arith.constant 0 : index
    %1 = vector.load %arg1[%c0, %c0_0] : memref<8x1xi32, #tpu.memory_space<vmem>>, vector<8x1xi32>
    %2 = vector.broadcast %1 : vector<8x1xi32> to vector<8x32xi32>
    %3 = arith.cmpi eq, %2, %0 : vector<8x32xi32>
    %4 = arith.extui %3 : vector<8x32xi1> to vector<8x32xi32>
    %5 = arith.sitofp %4 : vector<8x32xi32> to vector<8x32xf32>
    %c0_1 = arith.constant 0 : index
    %c0_2 = arith.constant 0 : index
    %6 = vector.load %arg2[%c0_1, %c0_2] : memref<32x16xf32, #tpu.memory_space<vmem>>, vector<32x16xf32>
    %cst = arith.constant dense<0.000000e+00> : vector<8x16xf32>
    %7 = tpu.matmul %5, %6, %cst {dimension_numbers = #tpu.dot_dimension_numbers<[1], [0], [0], [1], [0, 0, 1, 1], [], []>, precision = #tpu.contract_precision<fp32>} : vector<8x32xf32>, vector<32x16xf32>, vector<8x16xf32> -> vector<8x16xf32>
    %c0_3 = arith.constant 0 : index
    %c0_4 = arith.constant 0 : index
    %8 = vector.load %arg3[%c0_3, %c0_4] : memref<8x16xf32, #tpu.memory_space<vmem>>, vector<8x16xf32>
    tpu.vector_store %arg3[%c0_3, %c0_4], %7 {strides = array<i32>} : memref<8x16xf32, #tpu.memory_space<vmem>>, vector<8x16xf32>,
    return
  }
  func.func @transform_0(%arg0: i32) -> (i32, i32) {
    %c0_i32 = arith.constant 0 : i32
    %c0_i32_0 = arith.constant 0 : i32
    return %arg0, %c0_i32 : i32, i32
  }
  func.func @transform_1(%arg0: i32) -> (i32, i32) {
    %c0_i32 = arith.constant 0 : i32
    %c0_i32_0 = arith.constant 0 : i32
    %c0_i32_1 = arith.constant 0 : i32
    return %c0_i32, %c0_i32_0 : i32, i32
  }
  func.func @transform_2(%arg0: i32) -> (i32, i32) {
    %c0_i32 = arith.constant 0 : i32
    %c0_i32_0 = arith.constant 0 : i32
    return %arg0, %c0_i32 : i32, i32
  }
}

</mosaic_0001>

<llo_original>
// kernel: tpu_custom_call.1
$region0: #{tpu_custom_call.1}
  #allocation0 [shape = 'u32[]', space=smem, size = 0x4, offset = 0x4, fixed_abs, tag = 'smem constant byte address 0x4 - core index']
  #allocation1 [shape = 'u32[144,128]{1,0:T(1,128)}', space=vmem, size = 0x12000, scoped, tag = 'internal scratch']
  %s0 = inlined_call_operand.vmem [shape: s32[8,1], index: 0, kind: input, shape index: {}]
  %s1 = inlined_call_operand.vmem [shape: f32[32,16], index: 1, kind: input, shape index: {}]
  %s2 = inlined_call_operand.hbm [shape: f32[8,16], index: 2, kind: output, shape index: {}]
  %s3 = sld [smem:[#allocation0]]
  $region18: #{tpu_custom_call.1} parent=0
    _
  %s5 = ssub.s32 1, %s3
  %s6 = scalar_select 0, %s5, %s3
  $region1: #{tpu_custom_call.1} parent=0
    #allocation2 [shape = 'u8[4096]{0}', space=vmem, size = 0x1000, scoped, tag = 'output window, operand 0, single buffered']
    #allocation3 [shape = 's32[1]{0}', space=sflag, size = 0x4, scoped, tag = 'scoped memory for tpu_custom_call.1']
    %7 = vsyncpa [#allocation3], 0
    // Predicated region
    $region2: #{tpu_custom_call.1} parent=1 // pred_check
      _
    $region3: #{tpu_custom_call.1} parent=1 // pred_check_branch
      %9 = sbr.rel (0) target = $region5
    $region4: #{tpu_custom_call.1} parent=1 // pred_region
      _
    $region5: #{tpu_custom_call.1} parent=1 // pred_fallthru
      _
    // Predicated region
    $region6: #{tpu_custom_call.1} parent=1 // pred_check
      _
    $region7: #{tpu_custom_call.1} parent=1 // pred_check_branch
      %11 = sbr.rel (0) target = $region9
    $region8: #{tpu_custom_call.1} parent=1 // pred_region
      _
    $region9: #{tpu_custom_call.1} parent=1 // pred_fallthru
      _
    %v12 = vlaneseq
    %v13 = vand.u32 %v12, 127
    %v14 = vld [vmem:[%s0] sm:$0xff]
    %15 = vset.pattern.permute.xlu0 0
    %16 = vperm.xlu0 %15, %v14
    %v17 = vpop.permute.xlu0 %16
    %vm18 = vcmp.eq.s32.totalorder %v17, %v13
    %v19 = vsel %vm18, 1, 0
    %v20 = vcvt.s32.f32 %v19
    %v21 = vld [vmem:[%s1] sm:$0xff]
    %v22 = vld [vmem:[%s1 + $0x8] sm:$0xff]
    %v23 = vld [vmem:[%s1 + $0x10] sm:$0xff]
    %v24 = vld [vmem:[%s1 + $0x18] sm:$0xff]
    %vm25 = vcmask 261120
    %v27 = vsel %vm25, %v20, 0
    %29 = vmatprep.subr.mxu0 0.0
    %v30 = vand.u32 %v21, 4294901760
    %31 = vmatpush1.msra.mxu0 %v30
    %32 = vmatprep.subr.mxu0 0.0
    %v33 = vand.u32 %v22, 4294901760
    %34 = vmatpush1.msra.mxu0 %v33
    %35 = vmatprep.subr.mxu0 0.0
    %v36 = vand.u32 %v23, 4294901760
    %37 = vmatpush1.msra.mxu0 %v36
    %38 = vmatprep.subr.mxu0 0.0
    %v39 = vand.u32 %v24, 4294901760
    %40 = vmatpush1.msra.mxu0 %v39
    %41 = vmatprep.subr.mxu0 0.0
    %42 = vmatpush1.msra.mxu0 0.0
    %43 = vmatprep.subr.mxu0 0.0
    %44 = vmatpush1.msra.mxu0 0.0
    %45 = vmatprep.subr.mxu0 0.0
    %46 = vmatpush1.msra.mxu0 0.0
    %47 = vmatprep.subr.mxu0 0.0
    %48 = vmatpush1.msra.mxu0 0.0
    %49 = vmatprep.subr.mxu0 0.0
    %50 = vmatpush1.msra.mxu0 0.0
    %51 = vmatprep.subr.mxu0 0.0
    %52 = vmatpush1.msra.mxu0 0.0
    %53 = vmatprep.subr.mxu0 0.0
    %54 = vmatpush1.msra.mxu0 0.0
    %55 = vmatprep.subr.mxu0 0.0
    %56 = vmatpush1.msra.mxu0 0.0
    %57 = vmatprep.subr.mxu0 0.0
    %58 = vmatpush1.msra.mxu0 0.0
    %59 = vmatprep.subr.mxu0 0.0
    %60 = vmatpush1.msra.mxu0 0.0
    %61 = vmatprep.subr.mxu0 0.0
    %62 = vmatpush1.msra.mxu0 0.0
    %63 = vmatprep.subr.mxu0 0.0
    %64 = vmatpush1.msra.mxu0 0.0
    %65 = vmatprep.subr.mxu0 0.0
    %66 = vmatpush1.msra.mxu0 0.0
    %67 = vmatprep.subr.mxu0 0.0
    %68 = vmatpush1.msra.mxu0 0.0
    %69 = vmatprep.subr.mxu0 0.0
    %70 = vmatpush1.msra.mxu0 0.0
    %71 = vmatprep.subr.mxu0 0.0
    %72 = vmatpush1.msra.mxu0 0.0
    %73 = vmatprep.subr.mxu0 0.0
    %74 = vmatpush1.msra.mxu0 0.0
    %75 = vmatprep.subr.mxu0 0.0
    %76 = vmatpush1.msra.mxu0 0.0
    %77 = vmatprep.subr.mxu0 0.0
    %78 = vmatpush1.msra.mxu0 0.0
    %79 = vmatprep.subr.mxu0 0.0
    %80 = vmatpush1.msra.mxu0 0.0
    %81 = vmatprep.subr.mxu0 0.0
    %82 = vmatpush1.msra.mxu0 0.0
    %83 = vmatprep.subr.mxu0 0.0
    %84 = vmatpush1.msra.mxu0 0.0
    %85 = vmatprep.subr.mxu0 0.0
    %86 = vmatpush1.msra.mxu0 0.0
    %87 = vmatprep.subr.mxu0 0.0
    %88 = vmatpush1.msra.mxu0 0.0
    %89 = vmatprep.subr.mxu0 0.0
    %90 = vmatpush1.msra.mxu0 0.0
    %91 = vmatprep.subr.mxu0 0.0
    %92 = vmatpush1.msra.mxu0 0.0
    %93 = vmatprep.subr.mxu0 0.0
    %94 = vmatpush1.msra.mxu0 0.0
    %95 = vmatprep.subr.mxu0 0.0
    %96 = vmatpush1.msra.mxu0 0.0
    %97 = vmatprep.mubr.f32.mxu0 0.0
    %v98 = vand.u32 %v27, 4294901760
    %v99 = vsub.f32 %v27, %v98
    %v100 = vand.u32 %v99, 4294901760
    %v101 = vsub.f32 %v99, %v100
    %v102 = vand.u32 %v101, 4294901760
    %103 = vmatmul.mubr.f32.gmra.mrb[0].mxu0 %v102
    %v104 = vpop.f32.mrb[0].mxu0
    %v105 = vadd.f32 0.0, %v104
    %v106 = vpop.f32.mrb[0].mxu0
    %107 = vdwg.mxu0
    %108 = vmatprep.subr.mxu0 0.0
    %v109 = vand.u32 %v21, 4294901760
    %v110 = vsub.f32 %v21, %v109
    %v111 = vand.u32 %v110, 4294901760
    %v112 = vsub.f32 %v110, %v111
    %v113 = vand.u32 %v112, 4294901760
    %114 = vmatpush1.msra.mxu0 %v113
    %115 = vmatprep.subr.mxu0 0.0
    %v116 = vand.u32 %v22, 4294901760
    %v117 = vsub.f32 %v22, %v116
    %v118 = vand.u32 %v117, 4294901760
    %v119 = vsub.f32 %v117, %v118
    %v120 = vand.u32 %v119, 4294901760
    %121 = vmatpush1.msra.mxu0 %v120
    %122 = vmatprep.subr.mxu0 0.0
    %v123 = vand.u32 %v23, 4294901760
    %v124 = vsub.f32 %v23, %v123
    %v125 = vand.u32 %v124, 4294901760
    %v126 = vsub.f32 %v124, %v125
    %v127 = vand.u32 %v126, 4294901760
    %128 = vmatpush1.msra.mxu0 %v127
    %129 = vmatprep.subr.mxu0 0.0
    %v130 = vand.u32 %v24, 4294901760
    %v131 = vsub.f32 %v24, %v130
    %v132 = vand.u32 %v131, 4294901760
    %v133 = vsub.f32 %v131, %v132
    %v134 = vand.u32 %v133, 4294901760
    %135 = vmatpush1.msra.mxu0 %v134
    %136 = vmatprep.subr.mxu0 0.0
    %137 = vmatpush1.msra.mxu0 0.0
    %138 = vmatprep.subr.mxu0 0.0
    %139 = vmatpush1.msra.mxu0 0.0
    %140 = vmatprep.subr.mxu0 0.0
    %141 = vmatpush1.msra.mxu0 0.0
    %142 = vmatprep.subr.mxu0 0.0
    %143 = vmatpush1.msra.mxu0 0.0
    %144 = vmatprep.subr.mxu0 0.0
    %145 = vmatpush1.msra.mxu0 0.0
    %146 = vmatprep.subr.mxu0 0.0
    %147 = vmatpush1.msra.mxu0 0.0
    %148 = vmatprep.subr.mxu0 0.0
    %149 = vmatpush1.msra.mxu0 0.0
    %150 = vmatprep.subr.mxu0 0.0
    %151 = vmatpush1.msra.mxu0 0.0
    %152 = vmatprep.subr.mxu0 0.0
    %153 = vmatpush1.msra.mxu0 0.0
    %154 = vmatprep.subr.mxu0 0.0
    %155 = vmatpush1.msra.mxu0 0.0
    %156 = vmatprep.subr.mxu0 0.0
    %157 = vmatpush1.msra.mxu0 0.0
    %158 = vmatprep.subr.mxu0 0.0
    %159 = vmatpush1.msra.mxu0 0.0
    %160 = vmatprep.subr.mxu0 0.0
    %161 = vmatpush1.msra.mxu0 0.0
    %162 = vmatprep.subr.mxu0 0.0
    %163 = vmatpush1.msra.mxu0 0.0
    %164 = vmatprep.subr.mxu0 0.0
    %165 = vmatpush1.msra.mxu0 0.0
    %166 = vmatprep.subr.mxu0 0.0
    %167 = vmatpush1.msra.mxu0 0.0
    %168 = vmatprep.subr.mxu0 0.0
    %169 = vmatpush1.msra.mxu0 0.0
    %170 = vmatprep.subr.mxu0 0.0
    %171 = vmatpush1.msra.mxu0 0.0
    %172 = vmatprep.subr.mxu0 0.0
    %173 = vmatpush1.msra.mxu0 0.0
    %174 = vmatprep.subr.mxu0 0.0
    %175 = vmatpush1.msra.mxu0 0.0
    %176 = vmatprep.subr.mxu0 0.0
    %177 = vmatpush1.msra.mxu0 0.0
    %178 = vmatprep.subr.mxu0 0.0
    %179 = vmatpush1.msra.mxu0 0.0
    %180 = vmatprep.subr.mxu0 0.0
    %181 = vmatpush1.msra.mxu0 0.0
    %182 = vmatprep.subr.mxu0 0.0
    %183 = vmatpush1.msra.mxu0 0.0
    %184 = vmatprep.subr.mxu0 0.0
    %185 = vmatpush1.msra.mxu0 0.0
    %186 = vmatprep.subr.mxu0 0.0
    %187 = vmatpush1.msra.mxu0 0.0
    %188 = vmatprep.subr.mxu0 0.0
    %189 = vmatpush1.msra.mxu0 0.0
    %190 = vmatprep.subr.mxu0 0.0
    %191 = vmatpush1.msra.mxu0 0.0
    %192 = vmatprep.mubr.f32.mxu0 0.0
    %v193 = vand.u32 %v27, 4294901760
    %194 = vmatmul.mubr.f32.gmra.mrb[0].mxu0 %v193
    %v195 = vpop.f32.mrb[0].mxu0
    %v196 = vadd.f32 %v105, %v195
    %v197 = vpop.f32.mrb[0].mxu0
    %198 = vdwg.mxu0
    %199 = vmatprep.subr.mxu0 0.0
    %v200 = vand.u32 %v21, 4294901760
    %v201 = vsub.f32 %v21, %v200
    %202 = vmatpush1.msra.mxu0 %v201
    %203 = vmatprep.subr.mxu0 0.0
    %v204 = vand.u32 %v22, 4294901760
    %v205 = vsub.f32 %v22, %v204
    %206 = vmatpush1.msra.mxu0 %v205
    %207 = vmatprep.subr.mxu0 0.0
    %v208 = vand.u32 %v23, 4294901760
    %v209 = vsub.f32 %v23, %v208
    %210 = vmatpush1.msra.mxu0 %v209
    %211 = vmatprep.subr.mxu0 0.0
    %v212 = vand.u32 %v24, 4294901760
    %v213 = vsub.f32 %v24, %v212
    %214 = vmatpush1.msra.mxu0 %v213
    %215 = vmatprep.subr.mxu0 0.0
    %216 = vmatpush1.msra.mxu0 0.0
    %217 = vmatprep.subr.mxu0 0.0
    %218 = vmatpush1.msra.mxu0 0.0
    %219 = vmatprep.subr.mxu0 0.0
    %220 = vmatpush1.msra.mxu0 0.0
    %221 = vmatprep.subr.mxu0 0.0
    %222 = vmatpush1.msra.mxu0 0.0
    %223 = vmatprep.subr.mxu0 0.0
    %224 = vmatpush1.msra.mxu0 0.0
    %225 = vmatprep.subr.mxu0 0.0
    %226 = vmatpush1.msra.mxu0 0.0
    %227 = vmatprep.subr.mxu0 0.0
    %228 = vmatpush1.msra.mxu0 0.0
    %229 = vmatprep.subr.mxu0 0.0
    %230 = vmatpush1.msra.mxu0 0.0
    %231 = vmatprep.subr.mxu0 0.0
    %232 = vmatpush1.msra.mxu0 0.0
    %233 = vmatprep.subr.mxu0 0.0
    %234 = vmatpush1.msra.mxu0 0.0
    %235 = vmatprep.subr.mxu0 0.0
    %236 = vmatpush1.msra.mxu0 0.0
    %237 = vmatprep.subr.mxu0 0.0
    %238 = vmatpush1.msra.mxu0 0.0
    %239 = vmatprep.subr.mxu0 0.0
    %240 = vmatpush1.msra.mxu0 0.0
    %241 = vmatprep.subr.mxu0 0.0
    %242 = vmatpush1.msra.mxu0 0.0
    %243 = vmatprep.subr.mxu0 0.0
    %244 = vmatpush1.msra.mxu0 0.0
    %245 = vmatprep.subr.mxu0 0.0
    %246 = vmatpush1.msra.mxu0 0.0
    %247 = vmatprep.subr.mxu0 0.0
    %248 = vmatpush1.msra.mxu0 0.0
    %249 = vmatprep.subr.mxu0 0.0
    %250 = vmatpush1.msra.mxu0 0.0
    %251 = vmatprep.subr.mxu0 0.0
    %252 = vmatpush1.msra.mxu0 0.0
    %253 = vmatprep.subr.mxu0 0.0
    %254 = vmatpush1.msra.mxu0 0.0
    %255 = vmatprep.subr.mxu0 0.0
    %256 = vmatpush1.msra.mxu0 0.0
    %257 = vmatprep.subr.mxu0 0.0
    %258 = vmatpush1.msra.mxu0 0.0
    %259 = vmatprep.subr.mxu0 0.0
    %260 = vmatpush1.msra.mxu0 0.0
    %261 = vmatprep.subr.mxu0 0.0
    %262 = vmatpush1.msra.mxu0 0.0
    %263 = vmatprep.subr.mxu0 0.0
    %264 = vmatpush1.msra.mxu0 0.0
    %265 = vmatprep.subr.mxu0 0.0
    %266 = vmatpush1.msra.mxu0 0.0
    %267 = vmatprep.subr.mxu0 0.0
    %268 = vmatpush1.msra.mxu0 0.0
    %269 = vmatprep.subr.mxu0 0.0
    %270 = vmatpush1.msra.mxu0 0.0
    %271 = vmatprep.mubr.f32.mxu0 0.0
    %v272 = vand.u32 %v27, 4294901760
    %v273 = vsub.f32 %v27, %v272
    %274 = vmatmul.mubr.f32.gmra.mrb[0].mxu0 %v273
    %v275 = vpop.f32.mrb[0].mxu0
    %v276 = vadd.f32 %v196, %v275
    %v277 = vpop.f32.mrb[0].mxu0
    %278 = vdwg.mxu0
    %279 = vmatprep.subr.mxu0 0.0
    %v280 = vand.u32 %v21, 4294901760
    %281 = vmatpush1.msra.mxu0 %v280
    %282 = vmatprep.subr.mxu0 0.0
    %v283 = vand.u32 %v22, 4294901760
    %284 = vmatpush1.msra.mxu0 %v283
    %285 = vmatprep.subr.mxu0 0.0
    %v286 = vand.u32 %v23, 4294901760
    %287 = vmatpush1.msra.mxu0 %v286
    %288 = vmatprep.subr.mxu0 0.0
    %v289 = vand.u32 %v24, 4294901760
    %290 = vmatpush1.msra.mxu0 %v289
    %291 = vmatprep.subr.mxu0 0.0
    %292 = vmatpush1.msra.mxu0 0.0
    %293 = vmatprep.subr.mxu0 0.0
    %294 = vmatpush1.msra.mxu0 0.0
    %295 = vmatprep.subr.mxu0 0.0
    %296 = vmatpush1.msra.mxu0 0.0
    %297 = vmatprep.subr.mxu0 0.0
    %298 = vmatpush1.msra.mxu0 0.0
    %299 = vmatprep.subr.mxu0 0.0
    %300 = vmatpush1.msra.mxu0 0.0
    %301 = vmatprep.subr.mxu0 0.0
    %302 = vmatpush1.msra.mxu0 0.0
    %303 = vmatprep.subr.mxu0 0.0
    %304 = vmatpush1.msra.mxu0 0.0
    %305 = vmatprep.subr.mxu0 0.0
    %306 = vmatpush1.msra.mxu0 0.0
    %307 = vmatprep.subr.mxu0 0.0
    %308 = vmatpush1.msra.mxu0 0.0
    %309 = vmatprep.subr.mxu0 0.0
    %310 = vmatpush1.msra.mxu0 0.0
    %311 = vmatprep.subr.mxu0 0.0
    %312 = vmatpush1.msra.mxu0 0.0
    %313 = vmatprep.subr.mxu0 0.0
    %314 = vmatpush1.msra.mxu0 0.0
    %315 = vmatprep.subr.mxu0 0.0
    %316 = vmatpush1.msra.mxu0 0.0
    %317 = vmatprep.subr.mxu0 0.0
    %318 = vmatpush1.msra.mxu0 0.0
    %319 = vmatprep.subr.mxu0 0.0
    %320 = vmatpush1.msra.mxu0 0.0
    %321 = vmatprep.subr.mxu0 0.0
    %322 = vmatpush1.msra.mxu0 0.0
    %323 = vmatprep.subr.mxu0 0.0
    %324 = vmatpush1.msra.mxu0 0.0
    %325 = vmatprep.subr.mxu0 0.0
    %326 = vmatpush1.msra.mxu0 0.0
    %327 = vmatprep.subr.mxu0 0.0
    %328 = vmatpush1.msra.mxu0 0.0
    %329 = vmatprep.subr.mxu0 0.0
    %330 = vmatpush1.msra.mxu0 0.0
    %331 = vmatprep.subr.mxu0 0.0
    %332 = vmatpush1.msra.mxu0 0.0
    %333 = vmatprep.subr.mxu0 0.0
    %334 = vmatpush1.msra.mxu0 0.0
    %335 = vmatprep.subr.mxu0 0.0
    %336 = vmatpush1.msra.mxu0 0.0
    %337 = vmatprep.subr.mxu0 0.0
    %338 = vmatpush1.msra.mxu0 0.0
    %339 = vmatprep.subr.mxu0 0.0
    %340 = vmatpush1.msra.mxu0 0.0
    %341 = vmatprep.subr.mxu0 0.0
    %342 = vmatpush1.msra.mxu0 0.0
    %343 = vmatprep.subr.mxu0 0.0
    %344 = vmatpush1.msra.mxu0 0.0
    %345 = vmatprep.subr.mxu0 0.0
    %346 = vmatpush1.msra.mxu0 0.0
    %347 = vmatprep.mubr.f32.mxu0 0.0
    %v348 = vand.u32 %v27, 4294901760
    %v349 = vsub.f32 %v27, %v348
    %v350 = vand.u32 %v349, 4294901760
    %351 = vmatmul.mubr.f32.gmra.mrb[0].mxu0 %v350
    %v352 = vpop.f32.mrb[0].mxu0
    %v353 = vadd.f32 %v276, %v352
    %v354 = vpop.f32.mrb[0].mxu0
    %355 = vdwg.mxu0
    %356 = vmatprep.subr.mxu0 0.0
    %v357 = vand.u32 %v21, 4294901760
    %v358 = vsub.f32 %v21, %v357
    %v359 = vand.u32 %v358, 4294901760
    %360 = vmatpush1.msra.mxu0 %v359
    %361 = vmatprep.subr.mxu0 0.0
    %v362 = vand.u32 %v22, 4294901760
    %v363 = vsub.f32 %v22, %v362
    %v364 = vand.u32 %v363, 4294901760
    %365 = vmatpush1.msra.mxu0 %v364
    %366 = vmatprep.subr.mxu0 0.0
    %v367 = vand.u32 %v23, 4294901760
    %v368 = vsub.f32 %v23, %v367
    %v369 = vand.u32 %v368, 4294901760
    %370 = vmatpush1.msra.mxu0 %v369
    %371 = vmatprep.subr.mxu0 0.0
    %v372 = vand.u32 %v24, 4294901760
    %v373 = vsub.f32 %v24, %v372
    %v374 = vand.u32 %v373, 4294901760
    %375 = vmatpush1.msra.mxu0 %v374
    %376 = vmatprep.subr.mxu0 0.0
    %377 = vmatpush1.msra.mxu0 0.0
    %378 = vmatprep.subr.mxu0 0.0
    %379 = vmatpush1.msra.mxu0 0.0
    %380 = vmatprep.subr.mxu0 0.0
    %381 = vmatpush1.msra.mxu0 0.0
    %382 = vmatprep.subr.mxu0 0.0
    %383 = vmatpush1.msra.mxu0 0.0
    %384 = vmatprep.subr.mxu0 0.0
    %385 = vmatpush1.msra.mxu0 0.0
    %386 = vmatprep.subr.mxu0 0.0
    %387 = vmatpush1.msra.mxu0 0.0
    %388 = vmatprep.subr.mxu0 0.0
    %389 = vmatpush1.msra.mxu0 0.0
    %390 = vmatprep.subr.mxu0 0.0
    %391 = vmatpush1.msra.mxu0 0.0
    %392 = vmatprep.subr.mxu0 0.0
    %393 = vmatpush1.msra.mxu0 0.0
    %394 = vmatprep.subr.mxu0 0.0
    %395 = vmatpush1.msra.mxu0 0.0
    %396 = vmatprep.subr.mxu0 0.0
    %397 = vmatpush1.msra.mxu0 0.0
    %398 = vmatprep.subr.mxu0 0.0
    %399 = vmatpush1.msra.mxu0 0.0
    %400 = vmatprep.subr.mxu0 0.0
    %401 = vmatpush1.msra.mxu0 0.0
    %402 = vmatprep.subr.mxu0 0.0
    %403 = vmatpush1.msra.mxu0 0.0
    %404 = vmatprep.subr.mxu0 0.0
    %405 = vmatpush1.msra.mxu0 0.0
    %406 = vmatprep.subr.mxu0 0.0
    %407 = vmatpush1.msra.mxu0 0.0
    %408 = vmatprep.subr.mxu0 0.0
    %409 = vmatpush1.msra.mxu0 0.0
    %410 = vmatprep.subr.mxu0 0.0
    %411 = vmatpush1.msra.mxu0 0.0
    %412 = vmatprep.subr.mxu0 0.0
    %413 = vmatpush1.msra.mxu0 0.0
    %414 = vmatprep.subr.mxu0 0.0
    %415 = vmatpush1.msra.mxu0 0.0
    %416 = vmatprep.subr.mxu0 0.0
    %417 = vmatpush1.msra.mxu0 0.0
    %418 = vmatprep.subr.mxu0 0.0
    %419 = vmatpush1.msra.mxu0 0.0
    %420 = vmatprep.subr.mxu0 0.0
    %421 = vmatpush1.msra.mxu0 0.0
    %422 = vmatprep.subr.mxu0 0.0
    %423 = vmatpush1.msra.mxu0 0.0
    %424 = vmatprep.subr.mxu0 0.0
    %425 = vmatpush1.msra.mxu0 0.0
    %426 = vmatprep.subr.mxu0 0.0
    %427 = vmatpush1.msra.mxu0 0.0
    %428 = vmatprep.subr.mxu0 0.0
    %429 = vmatpush1.msra.mxu0 0.0
    %430 = vmatprep.subr.mxu0 0.0
    %431 = vmatpush1.msra.mxu0 0.0
    %432 = vmatprep.mubr.f32.mxu0 0.0
    %v433 = vand.u32 %v27, 4294901760
    %434 = vmatmul.mubr.f32.gmra.mrb[0].mxu0 %v433
    %v435 = vpop.f32.mrb[0].mxu0
    %v436 = vadd.f32 %v353, %v435
    %v437 = vpop.f32.mrb[0].mxu0
    %438 = vdwg.mxu0
    %439 = vmatprep.subr.mxu0 0.0
    %v440 = vand.u32 %v21, 4294901760
    %441 = vmatpush1.msra.mxu0 %v440
    %442 = vmatprep.subr.mxu0 0.0
    %v443 = vand.u32 %v22, 4294901760
    %444 = vmatpush1.msra.mxu0 %v443
    %445 = vmatprep.subr.mxu0 0.0
    %v446 = vand.u32 %v23, 4294901760
    %447 = vmatpush1.msra.mxu0 %v446
    %448 = vmatprep.subr.mxu0 0.0
    %v449 = vand.u32 %v24, 4294901760
    %450 = vmatpush1.msra.mxu0 %v449
    %451 = vmatprep.subr.mxu0 0.0
    %452 = vmatpush1.msra.mxu0 0.0
    %453 = vmatprep.subr.mxu0 0.0
    %454 = vmatpush1.msra.mxu0 0.0
    %455 = vmatprep.subr.mxu0 0.0
    %456 = vmatpush1.msra.mxu0 0.0
    %457 = vmatprep.subr.mxu0 0.0
    %458 = vmatpush1.msra.mxu0 0.0
    %459 = vmatprep.subr.mxu0 0.0
    %460 = vmatpush1.msra.mxu0 0.0
    %461 = vmatprep.subr.mxu0 0.0
    %462 = vmatpush1.msra.mxu0 0.0
    %463 = vmatprep.subr.mxu0 0.0
    %464 = vmatpush1.msra.mxu0 0.0
    %465 = vmatprep.subr.mxu0 0.0
    %466 = vmatpush1.msra.mxu0 0.0
    %467 = vmatprep.subr.mxu0 0.0
    %468 = vmatpush1.msra.mxu0 0.0
    %469 = vmatprep.subr.mxu0 0.0
    %470 = vmatpush1.msra.mxu0 0.0
    %471 = vmatprep.subr.mxu0 0.0
    %472 = vmatpush1.msra.mxu0 0.0
    %473 = vmatprep.subr.mxu0 0.0
    %474 = vmatpush1.msra.mxu0 0.0
    %475 = vmatprep.subr.mxu0 0.0
    %476 = vmatpush1.msra.mxu0 0.0
    %477 = vmatprep.subr.mxu0 0.0
    %478 = vmatpush1.msra.mxu0 0.0
    %479 = vmatprep.subr.mxu0 0.0
    %480 = vmatpush1.msra.mxu0 0.0
    %481 = vmatprep.subr.mxu0 0.0
    %482 = vmatpush1.msra.mxu0 0.0
    %483 = vmatprep.subr.mxu0 0.0
    %484 = vmatpush1.msra.mxu0 0.0
    %485 = vmatprep.subr.mxu0 0.0
    %486 = vmatpush1.msra.mxu0 0.0
    %487 = vmatprep.subr.mxu0 0.0
    %488 = vmatpush1.msra.mxu0 0.0
    %489 = vmatprep.subr.mxu0 0.0
    %490 = vmatpush1.msra.mxu0 0.0
    %491 = vmatprep.subr.mxu0 0.0
    %492 = vmatpush1.msra.mxu0 0.0
    %493 = vmatprep.subr.mxu0 0.0
    %494 = vmatpush1.msra.mxu0 0.0
    %495 = vmatprep.subr.mxu0 0.0
    %496 = vmatpush1.msra.mxu0 0.0
    %497 = vmatprep.subr.mxu0 0.0
    %498 = vmatpush1.msra.mxu0 0.0
    %499 = vmatprep.subr.mxu0 0.0
    %500 = vmatpush1.msra.mxu0 0.0
    %501 = vmatprep.subr.mxu0 0.0
    %502 = vmatpush1.msra.mxu0 0.0
    %503 = vmatprep.subr.mxu0 0.0
    %504 = vmatpush1.msra.mxu0 0.0
    %505 = vmatprep.subr.mxu0 0.0
    %506 = vmatpush1.msra.mxu0 0.0
    %507 = vmatprep.mubr.f32.mxu0 0.0
    %v508 = vand.u32 %v27, 4294901760
    %509 = vmatmul.mubr.f32.gmra.mrb[0].mxu0 %v508
    %v510 = vpop.f32.mrb[0].mxu0
    %v511 = vadd.f32 %v436, %v510
    %v512 = vpop.f32.mrb[0].mxu0
    %513 = vdwg.mxu0
    %vm514 = vcmask 130048
    %515 = vst.msk [vmem:[#allocation2] sm:$0xff] %vm514, %v511
    // Predicated region
    $region10: #{tpu_custom_call.1} parent=1 // pred_check
      _
    $region11: #{tpu_custom_call.1} parent=1 // pred_check_branch
      %517 = sbr.rel (0) target = $region13
    $region12: #{tpu_custom_call.1} parent=1 // pred_region
      %s519 = ssub.s32 128, 128
      %520 = vsyncadd [#allocation3], %s519
      %s522 = sshll.u32 [#allocation2], 4
      %s523 = int_to_ptr.vmem [resolvable:$true] %s522
      %525 = dma.vmem_to_hbm [thread:$0]  %s523, 128, %s2, [#allocation3]
    $region13: #{tpu_custom_call.1} parent=1 // pred_fallthru
      _
    // Predicated region
    $region14: #{tpu_custom_call.1} parent=1 // pred_check
      _
    $region15: #{tpu_custom_call.1} parent=1 // pred_check_branch
      %527 = sbr.rel (0) target = $region17
    $region16: #{tpu_custom_call.1} parent=1 // pred_region
      %528 = dma.done [#allocation3], 128
    $region17: #{tpu_custom_call.1} parent=1 // pred_fallthru
      _
    %529 = vsyncpa [#allocation3], 1

</llo_original>
